<compile_context>
chip_gen: v7x
topology: tpu7x:2x2x1
jax: 0.10.0
libtpu: 0.0.40
codegen_flags: <defaults>
</compile_context>

<pallas_src>
import functools

import jax
import jax.numpy as jnp
from jax.experimental import pallas as pl
from jax.experimental.pallas import tpu as pltpu


def _layernorm_kernel(gamma_ref, beta_ref, x_ref, o_ref, *, eps,
                      approx_recip, native_elementwise):
    # x_ref block: (TM, H). Full hidden dim is resident; reduce in-kernel.
    x = x_ref[...]
    xf = x.astype(jnp.float32)
    n = x.shape[-1]

    # Single-pass statistics: both reductions are independent, so they can
    # overlap on the XLU ports; accumulation is in f32.
    s1 = jnp.sum(xf, axis=-1, keepdims=True)            # (TM, 1)
    s2 = jnp.sum(xf * xf, axis=-1, keepdims=True)       # (TM, 1)
    mean = s1 * (1.0 / n)
    # Unbiased variance (torch.std default, ddof=1):  (s2 - n*mean^2) / (n-1).
    # For n == 1 this is 0/0 -> nan, matching torch.std's nan for a single elem.
    var = jnp.maximum((s2 - mean * s1) / (n - 1), 0.0)
    std = jnp.sqrt(var)

    # Per-row reciprocal on a (TM, 1) vector with gamma folded in once; the
    # approx form uses the otherwise-idle EUP slot (enabled for 16-bit outputs).
    scale = gamma_ref[0] * pl.reciprocal(std + eps, approx=approx_recip)  # (TM,1)

    if native_elementwise:
        # bf16/f16 elementwise on chips with a bf16 VALU; reductions stayed f32.
        dt = x.dtype
        y = (x - mean.astype(dt)) * scale.astype(dt) + beta_ref[0].astype(dt)
    else:
        y = (xf - mean) * scale + beta_ref[0]
    o_ref[...] = y.astype(o_ref.dtype)


def _tpu_generation_params():
    """Returns (vmem_budget_bytes, vmem_limit_bytes, min_steps, two_cores, is_v5)."""
    kind = ""
    try:
        kind = jax.devices()[0].device_kind.lower()
    except Exception:
        pass
    vmem_cap = None
    try:
        vmem_cap = int(pltpu.get_tpu_info().vmem_capacity_bytes)
    except Exception:
        pass
    two_cores = "v7" in kind
    if vmem_cap is None:
        vmem_cap = (64 if two_cores else 128) * 1024 * 1024
    if vmem_cap >= 128 * 1024 * 1024:
        # v5e / v6e class: 128 MiB physical VMEM, single TensorCore per chip.
        budget, limit = 48 * 1024 * 1024, 64 * 1024 * 1024
        min_steps = 8 if two_cores else 4
    else:
        # v7x class: 64 MiB VMEM per TensorCore, 2 TensorCores per chip.
        budget, limit = 36 * 1024 * 1024, 48 * 1024 * 1024
        min_steps = 8
        two_cores = True
    return budget, limit, min_steps, two_cores, ("v5" in kind)


def _pick_row_block(rows, H, itemsize, *, budget_bytes, min_steps):
    # Per-row VMEM bytes: double-buffered input + double-buffered output in the
    # native dtype plus ~2 f32-sized temporaries live inside the kernel.
    per_row = (4 * itemsize + 8) * H
    # Sublane packing: 8 rows for 4-byte, 16 for 2-byte, 32 for 1-byte dtypes.
    align = max(8, 32 // max(itemsize, 1))
    rb = max(align, min(2048, budget_bytes // max(per_row, 1)))
    rb = max(align, (rb // align) * align)
    # Keep enough grid steps for double-buffering (and cross-core sharding on
    # 2-TC chips) when rows are plentiful; min_steps is generation-aware so
    # single-TC chips keep their roofline-friendly large tiles.
    if rows >= min_steps * align:
        rb = min(rb, max(align, (pl.cdiv(rows, min_steps) // align) * align))
    # Never exceed the (alignment-rounded) row count.
    rb = min(rb, pl.cdiv(rows, align) * align)
    return rb


def layer_normalization(x, gamma, beta, eps=1e-5, row_block=None):
    """x: (..., H). gamma/beta: shape (1,) scalars (as in the PyTorch module)."""
    orig_shape = x.shape
    H = orig_shape[-1]
    rows = 1
    for d in orig_shape[:-1]:
        rows *= d
    x2 = x.reshape(rows, H)

    itemsize = jnp.dtype(x.dtype).itemsize
    budget, vmem_limit, min_steps, two_cores, is_v5 = _tpu_generation_params()
    if row_block is None:
        row_block = _pick_row_block(rows, H, itemsize,
                                    budget_bytes=budget, min_steps=min_steps)

    # Ragged tail: no pad/slice round-trip through HBM. Pallas pads the boundary
    # block on read (garbage rows are normalized and then discarded) and masks
    # the out-of-bounds portion of the boundary write.
    grid = (pl.cdiv(rows, row_block),)

    kernel = functools.partial(
        _layernorm_kernel,
        eps=float(eps),
        approx_recip=(itemsize < 4),
        native_elementwise=(itemsize == 2 and not is_v5),
    )

    def run(dim_sem):
        return pl.pallas_call(
            kernel,
            out_shape=jax.ShapeDtypeStruct((rows, H), x.dtype),
            grid=grid,
            in_specs=[
                pl.BlockSpec(memory_space=pltpu.SMEM),  # gamma (scalar)
                pl.BlockSpec(memory_space=pltpu.SMEM),  # beta  (scalar)
                pl.BlockSpec((row_block, H), lambda i: (i, 0)),
            ],
            out_specs=pl.BlockSpec((row_block, H), lambda i: (i, 0)),
            compiler_params=pltpu.CompilerParams(
                dimension_semantics=(dim_sem,),
                vmem_limit_bytes=vmem_limit,
            ),
        )(gamma, beta, x2)

    if two_cores and grid[0] >= 2:
        # v7x: shard the row axis across both TensorCores so the full chip HBM
        # bandwidth is used; fall back if this generation/runtime rejects it.
        try:
            out2 = jax.block_until_ready(run(pltpu.CORE_PARALLEL))
        except Exception:
            out2 = run("parallel")
    else:
        out2 = run("parallel")

    return out2.reshape(orig_shape)


if __name__ == "__main__":
    key = jax.random.PRNGKey(0)
    B, S, Hdim = 2, 8, 32
    x = jax.random.normal(key, (B, S, Hdim), dtype=jnp.float32)

    # Deterministic parameter init (matches nn.Parameter(torch.ones(1)/zeros(1)))
    gamma = jnp.ones((1,), dtype=jnp.float32)
    beta = jnp.zeros((1,), dtype=jnp.float32)
    eps = 1e-5

    out = layer_normalization(x, gamma, beta, eps=eps)
    out = jax.block_until_ready(out)

    # Reference in plain JAX (same unbiased-std semantics as torch.std)
    mean = jnp.mean(x, axis=-1, keepdims=True)
    std = jnp.std(x, axis=-1, keepdims=True, ddof=1)
    ref = gamma[0] * (x - mean) / (std + eps) + beta[0]
    assert jnp.allclose(out, ref, atol=1e-5, rtol=1e-5), "mismatch vs reference"

    print("KERNEL_OK")
</pallas_src>

<mosaic_0001>
module attributes {stable_mosaic.version = 11 : i64} {
  func.func @_layernorm_kernel(%arg0: i32, %arg1: memref<1xf32, #tpu.memory_space<smem>>, %arg2: memref<1xf32, #tpu.memory_space<smem>>, %arg3: memref<16x32xf32, #tpu.memory_space<vmem>>, %arg4: memref<16x32xf32, #tpu.memory_space<vmem>>) attributes {dimension_semantics = [#tpu.dimension_semantics<parallel>], iteration_bounds = array<i64: 1>, scalar_prefetch = 0 : i64, scratch_operands = 0 : i64, tpu.core_type = #tpu.core_type<tc>, window_params = [{transform_indices = @transform_0, window_bounds = array<i64: 1>}, {transform_indices = @transform_1, window_bounds = array<i64: 1>}, {transform_indices = @transform_2, window_bounds = array<i64: 16, 32>}, {transform_indices = @transform_3, window_bounds = array<i64: 16, 32>}]} {
    %c0 = arith.constant 0 : index
    %c0_0 = arith.constant 0 : index
    %0 = vector.load %arg3[%c0, %c0_0] : memref<16x32xf32, #tpu.memory_space<vmem>>, vector<16x32xf32>
    %cst = arith.constant dense<0.000000e+00> : vector<16xf32>
    %1 = vector.multi_reduction <add>, %0, %cst [1] : vector<16x32xf32> to vector<16xf32>
    %2 = vector.shape_cast %1 : vector<16xf32> to vector<16x1xf32>
    %3 = arith.mulf %0, %0 : vector<16x32xf32>
    %cst_1 = arith.constant dense<0.000000e+00> : vector<16xf32>
    %4 = vector.multi_reduction <add>, %3, %cst_1 [1] : vector<16x32xf32> to vector<16xf32>
    %5 = vector.shape_cast %4 : vector<16xf32> to vector<16x1xf32>
    %cst_2 = arith.constant 3.125000e-02 : f32
    %6 = vector.broadcast %cst_2 : f32 to vector<16x1xf32>
    %7 = arith.mulf %2, %6 : vector<16x1xf32>
    %8 = arith.mulf %7, %2 : vector<16x1xf32>
    %9 = arith.subf %5, %8 : vector<16x1xf32>
    %cst_3 = arith.constant 3.100000e+01 : f32
    %10 = vector.broadcast %cst_3 : f32 to vector<16x1xf32>
    %11 = arith.divf %9, %10 : vector<16x1xf32>
    %cst_4 = arith.constant 0.000000e+00 : f32
    %12 = vector.broadcast %cst_4 : f32 to vector<16x1xf32>
    %13 = arith.maximumf %11, %12 : vector<16x1xf32>
    %14 = math.sqrt %13 : vector<16x1xf32>
    %c0_5 = arith.constant 0 : index
    %15 = memref.load %arg1[%c0_5] : memref<1xf32, #tpu.memory_space<smem>>
    %cst_6 = arith.constant 9.99999974E-6 : f32
    %16 = vector.broadcast %cst_6 : f32 to vector<16x1xf32>
    %17 = arith.addf %14, %16 : vector<16x1xf32>
    %18 = tpu.reciprocal %17 : vector<16x1xf32> -> vector<16x1xf32>
    %19 = vector.broadcast %15 : f32 to vector<16x1xf32>
    %20 = arith.mulf %19, %18 : vector<16x1xf32>
    %21 = vector.broadcast %7 : vector<16x1xf32> to vector<16x32xf32>
    %22 = arith.subf %0, %21 : vector<16x32xf32>
    %23 = vector.broadcast %20 : vector<16x1xf32> to vector<16x32xf32>
    %24 = arith.mulf %22, %23 : vector<16x32xf32>
    %c0_7 = arith.constant 0 : index
    %25 = memref.load %arg2[%c0_7] : memref<1xf32, #tpu.memory_space<smem>>
    %26 = vector.broadcast %25 : f32 to vector<16x32xf32>
    %27 = arith.addf %24, %26 : vector<16x32xf32>
    %c0_8 = arith.constant 0 : index
    %c0_9 = arith.constant 0 : index
    %28 = vector.load %arg4[%c0_8, %c0_9] : memref<16x32xf32, #tpu.memory_space<vmem>>, vector<16x32xf32>
    tpu.vector_store %arg4[%c0_8, %c0_9], %27 {strides = array<i32>} : memref<16x32xf32, #tpu.memory_space<vmem>>, vector<16x32xf32>,
    return
  }
  func.func @transform_0(%arg0: i32) -> i32 {
    %c0_i32 = arith.constant 0 : i32
    %c0_i32_0 = arith.constant 0 : i32
    return %c0_i32 : i32
  }
  func.func @transform_1(%arg0: i32) -> i32 {
    %c0_i32 = arith.constant 0 : i32
    %c0_i32_0 = arith.constant 0 : i32
    return %c0_i32 : i32
  }
  func.func @transform_2(%arg0: i32) -> (i32, i32) {
    %c0_i32 = arith.constant 0 : i32
    %c0_i32_0 = arith.constant 0 : i32
    return %arg0, %c0_i32 : i32, i32
  }
  func.func @transform_3(%arg0: i32) -> (i32, i32) {
    %c0_i32 = arith.constant 0 : i32
    %c0_i32_0 = arith.constant 0 : i32
    return %arg0, %c0_i32 : i32, i32
  }
}

</mosaic_0001>

<llo_original>
// kernel: tpu_custom_call.1
$region0: #{tpu_custom_call.1}
  #allocation0 [shape = 'u32[]', space=smem, size = 0x4, offset = 0x4, fixed_abs, tag = 'smem constant byte address 0x4 - core index']
  #allocation1 [shape = 'u32[144,128]{1,0:T(1,128)}', space=vmem, size = 0x12000, scoped, tag = 'internal scratch']
  #allocation2 [shape = 'f32[1]{0:T(128)S(6)}', space=smem, size = 0x200, scoped, tag = 'scoped memory for tpu_custom_call.1']
  #allocation3 [shape = 'f32[1]{0:T(128)S(6)}', space=smem, size = 0x200, scoped, tag = 'scoped memory for tpu_custom_call.1']
  %s0 = inlined_call_operand.<no memory space> [shape: f32[1], index: 0, kind: input, shape index: {}]
  %s1 = inlined_call_operand.<no memory space> [shape: f32[1], index: 1, kind: input, shape index: {}]
  %s2 = inlined_call_operand.hbm [shape: f32[16,32], index: 2, kind: input, shape index: {}]
  %s3 = inlined_call_operand.hbm [shape: f32[16,32], index: 3, kind: output, shape index: {}]
  %s4 = sld [smem:[#allocation0]]
  $region26: #{tpu_custom_call.1} parent=0
    _
  %s6 = ssub.s32 1, %s4
  %s7 = scalar_select 0, %s6, %s4
  %8 = sst [smem:[#allocation2]] %s0
  %9 = sst [smem:[#allocation3]] %s1
  $region1: #{tpu_custom_call.1} parent=0
    #allocation4 [shape = 'u8[8192]{0}', space=vmem, size = 0x2000, scoped, tag = 'input window, operand 2, single buffered']
    #allocation5 [shape = 's32[1]{0}', space=sflag, size = 0x4, scoped, tag = 'scoped memory for tpu_custom_call.1']
    #allocation6 [shape = 's32[1]{0}', space=sflag, size = 0x4, scoped, tag = 'scoped memory for tpu_custom_call.1']
    #allocation7 [shape = 'u8[8192]{0}', space=vmem, size = 0x2000, scoped, tag = 'output window, operand 0, single buffered']
    %10 = vsyncpa [#allocation5], 0
    %11 = vsyncpa [#allocation6], 0
    // Predicated region
    $region2: #{tpu_custom_call.1} parent=1 // pred_check
      _
    $region3: #{tpu_custom_call.1} parent=1 // pred_check_branch
      %13 = sbr.rel (0) target = $region5
    $region4: #{tpu_custom_call.1} parent=1 // pred_region
      _
    $region5: #{tpu_custom_call.1} parent=1 // pred_fallthru
      _
    // Predicated region
    $region6: #{tpu_custom_call.1} parent=1 // pred_check
      _
    $region7: #{tpu_custom_call.1} parent=1 // pred_check_branch
      %15 = sbr.rel (0) target = $region9
    $region8: #{tpu_custom_call.1} parent=1 // pred_region
      _
    $region9: #{tpu_custom_call.1} parent=1 // pred_fallthru
      _
    // Predicated region
    $region10: #{tpu_custom_call.1} parent=1 // pred_check
      _
    $region11: #{tpu_custom_call.1} parent=1 // pred_check_branch
      %17 = sbr.rel (0) target = $region13
    $region12: #{tpu_custom_call.1} parent=1 // pred_region
      %s19 = ssub.s32 256, 256
      %20 = vsyncadd [#allocation5], %s19
      %s21 = sshll.u32 [#allocation4], 4
      %s22 = int_to_ptr.vmem [resolvable:$true] %s21
      %27 = dma.hbm_to_vmem [thread:$0]  %s2, 256, %s22, [#allocation5], 128, 128, 8
    $region13: #{tpu_custom_call.1} parent=1 // pred_fallthru
      _
    // Predicated region
    $region14: #{tpu_custom_call.1} parent=1 // pred_check
      _
    $region15: #{tpu_custom_call.1} parent=1 // pred_check_branch
      %29 = sbr.rel (0) target = $region17
    $region16: #{tpu_custom_call.1} parent=1 // pred_region
      %30 = dma.done [#allocation5], 256
    $region17: #{tpu_custom_call.1} parent=1 // pred_fallthru
      _
    %v31 = vld [vmem:[#allocation4] sm:$0xff]
    %v32 = vld [vmem:[#allocation4 + $0x8] sm:$0xff]
    %vm33 = vcmask 261120
    %v34 = vsel %vm33, %v31, 0.0
    %35 = vadd.xlane.f32.xlu0 %v34
    %v36 = vpop.xlane.xlu0 %35
    %v37 = vsel %vm33, %v32, 0.0
    %38 = vadd.xlane.f32.xlu0 %v37
    %v39 = vpop.xlane.xlu0 %38
    %v40 = vmul.f32 %v31, %v31
    %v41 = vmul.f32 %v32, %v32
    %v42 = vsel %vm33, %v40, 0.0
    %43 = vadd.xlane.f32.xlu0 %v42
    %v44 = vpop.xlane.xlu0 %43
    %v45 = vsel %vm33, %v41, 0.0
    %46 = vadd.xlane.f32.xlu0 %v45
    %v47 = vpop.xlane.xlu0 %46
    %v48 = vmul.f32 %v36, 0.03125
    %v49 = vmul.f32 %v39, 0.03125
    %v50 = vmul.f32 %v48, %v36
    %v51 = vmul.f32 %v49, %v39
    %v52 = vsub.f32 %v44, %v50
    %v53 = vsub.f32 %v47, %v51
    %v54 = vrcp.pop 31.0
    %v55 = vmul.f32 %v52, %v54
    %v56 = vmul.f32 %v53, %v54
    %v57 = vmax.f32 %v55, 0.0
    %v58 = vmax.f32 %v56, 0.0
    %v59 = vrsqrt.pop %v57
    %v60 = vmul.f32 %v57, %v59
    %vm61 = vcmp.eq.f32.partialorder %v57, inf
    %v62 = vsel %vm61, %v57, %v60
    %vm63 = vcmp.eq.f32.partialorder %v57, 0.0
    %v64 = vand.u32 %v57, 2147483648
    %v65 = vsel %vm63, %v64, %v62
    %v66 = vrsqrt.pop %v58
    %v67 = vmul.f32 %v58, %v66
    %vm68 = vcmp.eq.f32.partialorder %v58, inf
    %v69 = vsel %vm68, %v58, %v67
    %vm70 = vcmp.eq.f32.partialorder %v58, 0.0
    %v71 = vand.u32 %v58, 2147483648
    %v72 = vsel %vm70, %v71, %v69
    %s73 = sld [smem:[#allocation2]]
    %v74 = vadd.f32 %v65, 1e-05
    %v75 = vadd.f32 %v72, 1e-05
    %v76 = vrcp.pop %v74
    %v77 = vrcp.pop %v75
    %v78 = vstv %s73
    %v79 = vmul.f32 %v78, %v76
    %v80 = vmul.f32 %v78, %v77
    %v81 = vsub.f32 %v31, %v48
    %v82 = vsub.f32 %v32, %v49
    %v83 = vmul.f32 %v81, %v79
    %v84 = vmul.f32 %v82, %v80
    %s85 = sld [smem:[#allocation3]]
    %v86 = vstv %s85
    %v87 = vadd.f32 %v83, %v86
    %v88 = vadd.f32 %v84, %v86
    %89 = vst.msk [vmem:[#allocation7] sm:$0xff] %vm33, %v87
    %90 = vst.msk [vmem:[#allocation7 + $0x8] sm:$0xff] %vm33, %v88
    // Predicated region
    $region18: #{tpu_custom_call.1} parent=1 // pred_check
      _
    $region19: #{tpu_custom_call.1} parent=1 // pred_check_branch
      %92 = sbr.rel (0) target = $region21
    $region20: #{tpu_custom_call.1} parent=1 // pred_region
      %s94 = ssub.s32 256, 256
      %95 = vsyncadd [#allocation6], %s94
      %s96 = sshll.u32 [#allocation7], 4
      %s97 = int_to_ptr.vmem [resolvable:$true] %s96
      %102 = dma.vmem_to_hbm [thread:$0]  %s97, 256, %s3, [#allocation6], 128, 128, 8
    $region21: #{tpu_custom_call.1} parent=1 // pred_fallthru
      _
    // Predicated region
    $region22: #{tpu_custom_call.1} parent=1 // pred_check
      _
    $region23: #{tpu_custom_call.1} parent=1 // pred_check_branch
      %104 = sbr.rel (0) target = $region25
    $region24: #{tpu_custom_call.1} parent=1 // pred_region
      %105 = dma.done [#allocation6], 256
    $region25: #{tpu_custom_call.1} parent=1 // pred_fallthru
      _
    %106 = vsyncpa [#allocation5], 1
    %107 = vsyncpa [#allocation6], 1

</llo_original>
